<compile_context>
chip_gen: v7x
topology: tpu7x:2x2x1
jax: 0.10.0
libtpu: 0.0.40
codegen_flags: <defaults>
</compile_context>

<pallas_src>
import numpy as np
import jax
import jax.numpy as jnp
from jax import lax
from jax.experimental import pallas as pl
from jax.experimental.pallas import tpu as pltpu

# ---------------- configuration (small synthetic shapes) ----------------
SR = 16000
N_SAMPLES = 1024
NFFT = 64
HOP = 32
NBINS = NFFT // 2 + 1                      # 33
N_MELS = 24
T_FRAMES = (N_SAMPLES - NFFT) // HOP + 1   # 31
T_PAD = 32                                 # sublane-aligned time
LANES = 128                                # lane-dense slab width (narrow blocks)
D_MODEL = 256                              # PosEncoding(2048, 256)
MAX_SEQ = 2048
ANCHOR_DIM = 192                           # VOICE_EMBED_DIM == anchor_size
A_PAD = 256                                # padded anchor dim == slab width
ANCHOR_ROWS = 8                            # 2 anchors padded to 8 sublanes
CHUNKS = N_SAMPLES // HOP                  # 32 chunks of 32 samples
PRE_EMPHASIS = 0.97
INV_INT16 = 1.0 / 32768.0

# constant-slab layout (row offsets are multiples of 32; bf16 sublane tile is 16)
OFF_DFT = 0            # (64, 256)  folded Hann-window DFT (cos @ lanes 0..32, sin @ 64..96)
OFF_FB2 = 64           # (128, 128) duplicated mel fbank (re^2 rows 0..32, im^2 rows 64..96)
OFF_W12 = 192          # (128, 256) W1 @ W2^T  (valid rows 0..23, cols 0..191)
OFF_POS = 320          # (32, 256)  pos_enc @ W2^T (valid rows 0..30, cols 0..191)
SLAB_ROWS = 352

assert CHUNKS == HOP == T_PAD == 32


# ---------------- the single fused kernel ----------------
def campplus_fused_kernel(frames_ref, slab_ref, anchors_ref, out_ref):
    f32 = jnp.float32
    bf16 = jnp.bfloat16

    # ---- 1. preprocessing: int16 scale + global mean removal (pre-emphasis is
    #         folded into the DFT matrix).  frames[t] = samples[32*t : 32*t + 64];
    #         every sample appears exactly twice in the framed view (incl. wrap row 31).
    x = frames_ref[...] * INV_INT16                                      # (32, 64) f32
    m = jnp.sum(x, axis=1, keepdims=True)
    m = jnp.sum(m, axis=0, keepdims=True) * (1.0 / (2.0 * N_SAMPLES))    # global mean
    xc = (x - m).astype(bf16)

    # ---- 2. folded Hann-window DFT (pre-emphasis baked in) -> power -> mel ----
    dft = slab_ref[pl.ds(OFF_DFT, NFFT), :]                              # (64, 256) bf16
    r = jnp.dot(xc, dft, preferred_element_type=f32)                     # (32, 256)
    spec = r[:, :LANES]                                                  # re @ 0..32, im @ 64..96
    power = (spec * spec).astype(bf16)                                   # (32, 128)

    fb2 = slab_ref[pl.ds(OFF_FB2, LANES), pl.ds(0, LANES)]               # (128, 128) bf16
    mel = jnp.dot(power, fb2, preferred_element_type=f32)                # (32, 128)
    mel = jnp.log(jnp.maximum(mel, 1e-5))

    row = lax.broadcasted_iota(jnp.int32, (T_PAD, LANES), 0)
    col = lax.broadcasted_iota(jnp.int32, (T_PAD, LANES), 1)
    mel_valid = jnp.where(row < T_FRAMES, mel, 0.0)                      # zero padded frame row
    mel = mel - jnp.sum(mel_valid, axis=0, keepdims=True) * (1.0 / T_FRAMES)

    # ---- 3. surrogate backend: logits = (mel@W1 + pos) @ (anchors@W2)^T
    #         with W12 = W1@W2^T and POSP = pos@W2^T precomputed offline.
    w12 = slab_ref[pl.ds(OFF_W12, LANES), :]                             # (128, 256) bf16
    posp = slab_ref[pl.ds(OFF_POS, T_PAD), :]                            # (32, 256) bf16
    feat = (jnp.dot(mel.astype(bf16), w12, preferred_element_type=f32)
            + posp.astype(f32))                                          # (32, 256) f32
    logits = lax.dot_general(feat.astype(bf16), anchors_ref[...],
                             (((1,), (1,)), ((), ())),
                             preferred_element_type=f32)                 # (32, 8); cols 0,1 valid

    # ---- 4. argmax (VPU compare) + lane-dense output assembly ----
    l0 = logits[:, 0:1]
    l1 = logits[:, 1:2]
    arg = (l1 > l0).astype(f32)                                          # first-wins on ties
    zw = jnp.zeros((T_PAD, LANES), f32)
    l0b = l0 + zw
    l1b = l1 + zw
    argb = arg + zw

    out = jnp.where(col == 0, l0b, 0.0)
    out = jnp.where(col == 1, l1b, out)
    out = jnp.where(col == 2, argb, out)
    out_ref[...] = out


# ---------------- forward wrapper (single pallas_call) ----------------
def campplus_forward(audio, voice_embed_x, voice_embed_y, control_factor, params):
    # framing in XLA (free at this size): frame t = [chunk t, chunk t+1]; row 31 is padding
    x2 = audio.reshape(CHUNKS, HOP).astype(jnp.float32)                  # (32, 32)
    frames = jnp.concatenate([x2, jnp.roll(x2, -1, axis=0)], axis=1)     # (32, 64)
    frames = frames[None]                                                # (B=1, 32, 64)
    B = frames.shape[0]

    # anchor blend (runtime cf / voice embeds -> tiny fused XLA elementwise op)
    ve = jnp.concatenate([voice_embed_x.reshape(1, -1),
                          voice_embed_y.reshape(1, -1)], axis=0)          # (2, 192)
    cf = control_factor.reshape(()).astype(jnp.float32)
    anchors = ve * cf + params["base"] * (1.0 - cf)                       # (2, 192)
    anchors_pad = jnp.zeros((ANCHOR_ROWS, A_PAD), jnp.float32)
    anchors_pad = anchors_pad.at[:2, :ANCHOR_DIM].set(anchors).astype(jnp.bfloat16)

    flops = 2 * (T_PAD * NFFT * A_PAD + T_PAD * LANES * LANES
                 + T_PAD * LANES * A_PAD + T_PAD * A_PAD * ANCHOR_ROWS) * B
    bytes_accessed = (T_PAD * NFFT * 4 + SLAB_ROWS * A_PAD * 2
                      + ANCHOR_ROWS * A_PAD * 2 + T_PAD * LANES * 4) * B

    combo = pl.pallas_call(
        campplus_fused_kernel,
        out_shape=jax.ShapeDtypeStruct((B, T_PAD, LANES), jnp.float32),
        grid=(B,),
        in_specs=[
            pl.BlockSpec((None, T_PAD, NFFT), lambda b: (b, 0, 0)),        # per-batch frames
            pl.BlockSpec((SLAB_ROWS, A_PAD), lambda b: (0, 0)),            # resident weight slab
            pl.BlockSpec((ANCHOR_ROWS, A_PAD), lambda b: (0, 0)),          # resident anchors
        ],
        out_specs=pl.BlockSpec((None, T_PAD, LANES), lambda b: (b, 0, 0)),
        compiler_params=pltpu.CompilerParams(dimension_semantics=("parallel",)),
        cost_estimate=pl.CostEstimate(flops=flops,
                                      transcendentals=T_PAD * LANES * B,
                                      bytes_accessed=bytes_accessed),
    )(frames, params["slab"], anchors_pad)

    out0 = combo[0]
    logits = out0[:T_FRAMES, :2]
    arg = out0[:T_FRAMES, 2].astype(jnp.int32)
    # frame-change detection on 31 scalars -> trivial XLA ops on device
    change = (arg[1:] != arg[:-1]).astype(jnp.int32)
    count = jnp.sum(change)
    # TODO(synk): torch.nonzero has a data-dependent output shape; return a fixed-size
    # index buffer + device count instead (compact lazily on host only if needed).
    indices = jnp.nonzero(change, size=T_FRAMES - 1, fill_value=-1)[0].astype(jnp.int32)
    return count, indices, logits, arg, change


campplus_forward = jax.jit(campplus_forward)


# ---------------- deterministic parameter construction (host-side glue) ----------------
def melscale_fbanks_htk(n_freqs, f_min, f_max, n_mels, sample_rate):
    all_freqs = np.linspace(0.0, sample_rate // 2, n_freqs).astype(np.float64)
    hz_to_mel = lambda f: 2595.0 * np.log10(1.0 + f / 700.0)
    mel_to_hz = lambda m: 700.0 * (10.0 ** (m / 2595.0) - 1.0)
    m_pts = np.linspace(hz_to_mel(f_min), hz_to_mel(f_max), n_mels + 2)
    f_pts = mel_to_hz(m_pts)
    f_diff = f_pts[1:] - f_pts[:-1]
    slopes = f_pts[None, :] - all_freqs[:, None]
    down = -slopes[:, :-2] / f_diff[:-1]
    up = slopes[:, 2:] / f_diff[1:]
    return np.maximum(0.0, np.minimum(down, up)).astype(np.float64)      # (n_freqs, n_mels)


def pos_encoding_table(max_seq_len, d):
    position = np.arange(0, max_seq_len, dtype=np.float32)[:, None]
    div_term = np.exp(np.arange(0, d, 2, dtype=np.float32) * (-np.log(10000.0) / d))
    pe = np.zeros((max_seq_len, d), np.float32)
    pe[:, 0::2] = np.sin(position * div_term)
    pe[:, 1::2] = np.cos(position * div_term[: d // 2])
    return np.concatenate([np.zeros((1, d), np.float32), pe], axis=0)    # (max_seq_len+1, d)


def windowed_dft_mats():
    n = np.arange(NFFT, dtype=np.float64)[:, None]
    k = np.arange(NBINS, dtype=np.float64)[None, :]
    win = np.hanning(NFFT)[:, None]                                      # hann[0] == 0 exactly
    wb_cos = win * np.cos(2.0 * np.pi * n * k / NFFT)
    wb_sin = -win * np.sin(2.0 * np.pi * n * k / NFFT)
    return wb_cos, wb_sin                                                # (64, 33) each


def build_params(wb_cos, wb_sin, fb, pos_slice, w1, w2, base):
    # fold the pre-emphasis filter into the windowed DFT: D'[m] = wb[m] - 0.97*wb[m+1]
    # (exact, incl. frame boundaries, because hann[0] == 0)
    def fold(wb):
        sh = np.zeros_like(wb)
        sh[:-1] = wb[1:]
        return wb - PRE_EMPHASIS * sh

    dcos, dsin = fold(wb_cos), fold(wb_sin)

    slab = np.zeros((SLAB_ROWS, A_PAD), np.float32)
    slab[OFF_DFT:OFF_DFT + NFFT, :NBINS] = dcos
    slab[OFF_DFT:OFF_DFT + NFFT, 64:64 + NBINS] = dsin
    slab[OFF_FB2:OFF_FB2 + NBINS, :N_MELS] = fb
    slab[OFF_FB2 + 64:OFF_FB2 + 64 + NBINS, :N_MELS] = fb
    slab[OFF_W12:OFF_W12 + N_MELS, :ANCHOR_DIM] = w1 @ w2.T
    slab[OFF_POS:OFF_POS + T_FRAMES, :ANCHOR_DIM] = pos_slice @ w2.T
    return dict(slab=jnp.asarray(slab, dtype=jnp.bfloat16),
                base=jnp.asarray(base, dtype=jnp.float32))


if __name__ == "__main__":
    key = jax.random.PRNGKey(0)
    k_audio, k_w1, k_w2 = jax.random.split(key, 3)

    # inputs (int16-valued audio, zero voice embeds, control_factor = 0 like the script)
    audio = jax.random.randint(k_audio, (1, N_SAMPLES), -32768, 32768,
                               dtype=jnp.int32).astype(jnp.float32)
    voice_embed_x = jnp.zeros((1, ANCHOR_DIM), jnp.float32)
    voice_embed_y = jnp.zeros((1, ANCHOR_DIM), jnp.float32)
    control_factor = jnp.array([0.0], jnp.float32)

    # deterministic parameters
    wb_cos, wb_sin = windowed_dft_mats()
    fb = melscale_fbanks_htk(NBINS, 20.0, SR // 2, N_MELS, SR)            # (33, 24)
    pos_table = pos_encoding_table(MAX_SEQ, D_MODEL)
    pos_slice = pos_table[1:T_FRAMES + 1].astype(np.float64)              # (31, 256)
    w1 = np.asarray(jax.random.normal(k_w1, (N_MELS, D_MODEL), jnp.float32), np.float64) * 0.1
    w2 = np.asarray(jax.random.normal(k_w2, (ANCHOR_DIM, D_MODEL), jnp.float32), np.float64) * 0.1
    embed = np.zeros((1, 1, ANCHOR_DIM), np.float64)
    embed[:, :, 1::2] = 1.0
    base = np.concatenate([embed, 1.0 - embed], axis=0).reshape(2, ANCHOR_DIM)

    params = build_params(wb_cos, wb_sin, fb, pos_slice, w1, w2, base)

    count, indices, logits, arg, change = campplus_forward(
        audio, voice_embed_x, voice_embed_y, control_factor, params)
    jax.block_until_ready((count, indices, logits, arg, change))

    # ---- numpy reference (same surrogate math, un-fused, float64) ----
    a = np.asarray(audio, np.float64).reshape(-1) * INV_INT16
    a = a - a.mean()
    y = a.copy()
    y[1:] = a[1:] - PRE_EMPHASIS * a[:-1]
    frames_r = np.stack([y[t * HOP:t * HOP + NFFT] for t in range(T_FRAMES)])
    real = frames_r @ wb_cos
    imag = frames_r @ wb_sin
    mel_r = np.log(np.maximum((real * real + imag * imag) @ fb, 1e-5))
    mel_r = mel_r - mel_r.mean(axis=0, keepdims=True)
    cfv = float(control_factor[0])
    ve_np = np.concatenate([np.asarray(voice_embed_x), np.asarray(voice_embed_y)], 0).astype(np.float64)
    anchors_r = ve_np * cfv + base * (1.0 - cfv)
    feat_r = mel_r @ w1 + pos_slice
    logits_r = feat_r @ (anchors_r @ w2).T                                # (31, 2)

    logits_np = np.asarray(logits)
    np.testing.assert_allclose(logits_np, logits_r, rtol=3e-2, atol=1.0)

    arg_chk = (logits_np[:, 1] > logits_np[:, 0]).astype(np.int32)
    change_chk = (arg_chk[1:] != arg_chk[:-1]).astype(np.int32)
    assert np.array_equal(np.asarray(arg), arg_chk)
    assert np.array_equal(np.asarray(change), change_chk)
    assert int(count) == int(change_chk.sum())
    assert np.array_equal(np.asarray(indices)[:int(count)],
                          np.nonzero(change_chk)[0].astype(np.int32))
    assert logits.shape == (T_FRAMES, 2)
    print("KERNEL_OK")
</pallas_src>

<mosaic_0001>
module attributes {stable_mosaic.version = 11 : i64} {
  func.func @campplus_fused_kernel(%arg0: i32, %arg1: memref<1x32x64xf32, #tpu.memory_space<vmem>>, %arg2: memref<352x256xbf16, #tpu.memory_space<vmem>>, %arg3: memref<8x256xbf16, #tpu.memory_space<vmem>>, %arg4: memref<1x32x128xf32, #tpu.memory_space<vmem>>) attributes {dimension_semantics = [#tpu.dimension_semantics<parallel>], iteration_bounds = array<i64: 1>, scalar_prefetch = 0 : i64, scratch_operands = 0 : i64, tpu.core_type = #tpu.core_type<tc>, window_params = [{transform_indices = @transform_0, window_bounds = array<i64: 1, 32, 64>}, {pipeline_mode = #tpu.pipeline_mode<synchronous>, transform_indices = @transform_1, window_bounds = array<i64: 352, 256>}, {pipeline_mode = #tpu.pipeline_mode<synchronous>, transform_indices = @transform_2, window_bounds = array<i64: 8, 256>}, {transform_indices = @transform_3, window_bounds = array<i64: 1, 32, 128>}]} {
    %c0 = arith.constant 0 : index
    %c0_0 = arith.constant 0 : index
    %c0_1 = arith.constant 0 : index
    %0 = vector.load %arg1[%c0, %c0_0, %c0_1] : memref<1x32x64xf32, #tpu.memory_space<vmem>>, vector<1x32x64xf32>
    %1 = vector.shape_cast %0 : vector<1x32x64xf32> to vector<32x64xf32>
    %cst = arith.constant 3.05175781E-5 : f32
    %2 = vector.broadcast %cst : f32 to vector<32x64xf32>
    %3 = arith.mulf %1, %2 : vector<32x64xf32>
    %cst_2 = arith.constant dense<0.000000e+00> : vector<32xf32>
    %4 = vector.multi_reduction <add>, %3, %cst_2 [1] : vector<32x64xf32> to vector<32xf32>
    %5 = vector.shape_cast %4 : vector<32xf32> to vector<32x1xf32>
    %cst_3 = arith.constant dense<0.000000e+00> : vector<1xf32>
    %6 = vector.multi_reduction <add>, %5, %cst_3 [0] : vector<32x1xf32> to vector<1xf32>
    %7 = vector.shape_cast %6 : vector<1xf32> to vector<1x1xf32>
    %cst_4 = arith.constant 4.8828125E-4 : f32
    %8 = vector.broadcast %cst_4 : f32 to vector<1x1xf32>
    %9 = arith.mulf %7, %8 : vector<1x1xf32>
    %10 = vector.broadcast %9 : vector<1x1xf32> to vector<32x64xf32>
    %11 = arith.subf %3, %10 : vector<32x64xf32>
    %12 = arith.truncf %11 : vector<32x64xf32> to vector<32x64xbf16>
    %c0_5 = arith.constant 0 : index
    %c0_6 = arith.constant 0 : index
    %13 = vector.load %arg2[%c0_5, %c0_6] : memref<352x256xbf16, #tpu.memory_space<vmem>>, vector<64x256xbf16>
    %cst_7 = arith.constant dense<0.000000e+00> : vector<32x256xf32>
    %14 = tpu.matmul %12, %13, %cst_7 {dimension_numbers = #tpu.dot_dimension_numbers<[1], [0], [0], [1], [0, 0, 1, 1], [], []>} : vector<32x64xbf16>, vector<64x256xbf16>, vector<32x256xf32> -> vector<32x256xf32>
    %15 = vector.extract_strided_slice %14 {offsets = [0, 0], sizes = [32, 128], strides = [1, 1]} : vector<32x256xf32> to vector<32x128xf32>
    %16 = arith.mulf %15, %15 : vector<32x128xf32>
    %17 = arith.truncf %16 : vector<32x128xf32> to vector<32x128xbf16>
    %c64 = arith.constant 64 : index
    %c0_8 = arith.constant 0 : index
    %18 = vector.load %arg2[%c64, %c0_8] : memref<352x256xbf16, #tpu.memory_space<vmem>>, vector<128x128xbf16>
    %cst_9 = arith.constant dense<0.000000e+00> : vector<32x128xf32>
    %19 = tpu.matmul %17, %18, %cst_9 {dimension_numbers = #tpu.dot_dimension_numbers<[1], [0], [0], [1], [0, 0, 1, 1], [], []>} : vector<32x128xbf16>, vector<128x128xbf16>, vector<32x128xf32> -> vector<32x128xf32>
    %cst_10 = arith.constant 9.99999974E-6 : f32
    %20 = vector.broadcast %cst_10 : f32 to vector<32x128xf32>
    %21 = arith.maximumf %19, %20 : vector<32x128xf32>
    %22 = math.log %21 : vector<32x128xf32>
    %23 = tpu.iota {dimensions = array<i32: 0>} : vector<32x128xi32>
    %24 = tpu.iota {dimensions = array<i32: 1>} : vector<32x128xi32>
    %c31_i32 = arith.constant 31 : i32
    %25 = vector.broadcast %c31_i32 : i32 to vector<32x128xi32>
    %26 = arith.cmpi slt, %23, %25 : vector<32x128xi32>
    %cst_11 = arith.constant 0.000000e+00 : f32
    %27 = vector.broadcast %cst_11 : f32 to vector<32x128xf32>
    %28 = arith.select %26, %22, %27 : vector<32x128xi1>, vector<32x128xf32>
    %cst_12 = arith.constant dense<0.000000e+00> : vector<128xf32>
    %29 = vector.multi_reduction <add>, %28, %cst_12 [0] : vector<32x128xf32> to vector<128xf32>
    %30 = vector.shape_cast %29 : vector<128xf32> to vector<1x128xf32>
    %cst_13 = arith.constant 0.0322580636 : f32
    %31 = vector.broadcast %cst_13 : f32 to vector<1x128xf32>
    %32 = arith.mulf %30, %31 : vector<1x128xf32>
    %33 = vector.broadcast %32 : vector<1x128xf32> to vector<32x128xf32>
    %34 = arith.subf %22, %33 : vector<32x128xf32>
    %c192 = arith.constant 192 : index
    %c0_14 = arith.constant 0 : index
    %35 = vector.load %arg2[%c192, %c0_14] : memref<352x256xbf16, #tpu.memory_space<vmem>>, vector<128x256xbf16>
    %c320 = arith.constant 320 : index
    %c0_15 = arith.constant 0 : index
    %36 = vector.load %arg2[%c320, %c0_15] : memref<352x256xbf16, #tpu.memory_space<vmem>>, vector<32x256xbf16>
    %37 = arith.truncf %34 : vector<32x128xf32> to vector<32x128xbf16>
    %cst_16 = arith.constant dense<0.000000e+00> : vector<32x256xf32>
    %38 = tpu.matmul %37, %35, %cst_16 {dimension_numbers = #tpu.dot_dimension_numbers<[1], [0], [0], [1], [0, 0, 1, 1], [], []>} : vector<32x128xbf16>, vector<128x256xbf16>, vector<32x256xf32> -> vector<32x256xf32>
    %39 = arith.extf %36 : vector<32x256xbf16> to vector<32x256xf32>
    %40 = arith.addf %38, %39 : vector<32x256xf32>
    %41 = arith.truncf %40 : vector<32x256xf32> to vector<32x256xbf16>
    %c0_17 = arith.constant 0 : index
    %c0_18 = arith.constant 0 : index
    %42 = vector.load %arg3[%c0_17, %c0_18] : memref<8x256xbf16, #tpu.memory_space<vmem>>, vector<8x256xbf16>
    %cst_19 = arith.constant dense<0.000000e+00> : vector<32x8xf32>
    %43 = tpu.matmul %41, %42, %cst_19 {dimension_numbers = #tpu.dot_dimension_numbers<[1], [1], [0], [0], [0, 0, 1, 0], [], []>} : vector<32x256xbf16>, vector<8x256xbf16>, vector<32x8xf32> -> vector<32x8xf32>
    %44 = vector.extract_strided_slice %43 {offsets = [0, 0], sizes = [32, 1], strides = [1, 1]} : vector<32x8xf32> to vector<32x1xf32>
    %45 = vector.extract_strided_slice %43 {offsets = [0, 1], sizes = [32, 1], strides = [1, 1]} : vector<32x8xf32> to vector<32x1xf32>
    %46 = arith.cmpf ogt, %45, %44 : vector<32x1xf32>
    %47 = arith.extui %46 : vector<32x1xi1> to vector<32x1xi32>
    %48 = arith.sitofp %47 : vector<32x1xi32> to vector<32x1xf32>
    %cst_20 = arith.constant 0.000000e+00 : f32
    %49 = vector.broadcast %cst_20 : f32 to vector<32x128xf32>
    %50 = vector.broadcast %44 : vector<32x1xf32> to vector<32x128xf32>
    %51 = arith.addf %50, %49 : vector<32x128xf32>
    %52 = vector.broadcast %45 : vector<32x1xf32> to vector<32x128xf32>
    %53 = arith.addf %52, %49 : vector<32x128xf32>
    %54 = vector.broadcast %48 : vector<32x1xf32> to vector<32x128xf32>
    %55 = arith.addf %54, %49 : vector<32x128xf32>
    %c0_i32 = arith.constant 0 : i32
    %56 = vector.broadcast %c0_i32 : i32 to vector<32x128xi32>
    %57 = arith.cmpi eq, %24, %56 : vector<32x128xi32>
    %cst_21 = arith.constant 0.000000e+00 : f32
    %58 = vector.broadcast %cst_21 : f32 to vector<32x128xf32>
    %59 = arith.select %57, %51, %58 : vector<32x128xi1>, vector<32x128xf32>
    %c1_i32 = arith.constant 1 : i32
    %60 = vector.broadcast %c1_i32 : i32 to vector<32x128xi32>
    %61 = arith.cmpi eq, %24, %60 : vector<32x128xi32>
    %62 = arith.select %61, %53, %59 : vector<32x128xi1>, vector<32x128xf32>
    %c2_i32 = arith.constant 2 : i32
    %63 = vector.broadcast %c2_i32 : i32 to vector<32x128xi32>
    %64 = arith.cmpi eq, %24, %63 : vector<32x128xi32>
    %65 = arith.select %64, %55, %62 : vector<32x128xi1>, vector<32x128xf32>
    %c0_22 = arith.constant 0 : index
    %c0_23 = arith.constant 0 : index
    %c0_24 = arith.constant 0 : index
    %66 = vector.load %arg4[%c0_22, %c0_23, %c0_24] : memref<1x32x128xf32, #tpu.memory_space<vmem>>, vector<1x32x128xf32>
    %67 = vector.shape_cast %66 : vector<1x32x128xf32> to vector<32x128xf32>
    %68 = vector.shape_cast %65 : vector<32x128xf32> to vector<1x32x128xf32>
    tpu.vector_store %arg4[%c0_22, %c0_23, %c0_24], %68 {strides = array<i32>} : memref<1x32x128xf32, #tpu.memory_space<vmem>>, vector<1x32x128xf32>,
    return
  }
  func.func @transform_0(%arg0: i32) -> (i32, i32, i32) {
    %c0_i32 = arith.constant 0 : i32
    %c0_i32_0 = arith.constant 0 : i32
    %c0_i32_1 = arith.constant 0 : i32
    return %arg0, %c0_i32, %c0_i32_0 : i32, i32, i32
  }
  func.func @transform_1(%arg0: i32) -> (i32, i32) {
    %c0_i32 = arith.constant 0 : i32
    %c0_i32_0 = arith.constant 0 : i32
    %c0_i32_1 = arith.constant 0 : i32
    return %c0_i32, %c0_i32_0 : i32, i32
  }
  func.func @transform_2(%arg0: i32) -> (i32, i32) {
    %c0_i32 = arith.constant 0 : i32
    %c0_i32_0 = arith.constant 0 : i32
    %c0_i32_1 = arith.constant 0 : i32
    return %c0_i32, %c0_i32_0 : i32, i32
  }
  func.func @transform_3(%arg0: i32) -> (i32, i32, i32) {
    %c0_i32 = arith.constant 0 : i32
    %c0_i32_0 = arith.constant 0 : i32
    %c0_i32_1 = arith.constant 0 : i32
    return %arg0, %c0_i32, %c0_i32_0 : i32, i32, i32
  }
}

</mosaic_0001>

<llo_original>
// kernel: campplus_forward.1
$region0: #{campplus_forward.1}
  #allocation0 [shape = 'u32[]', space=smem, size = 0x4, offset = 0x4, fixed_abs, tag = 'smem constant byte address 0x4 - core index']
  #allocation1 [shape = 'u32[144,128]{1,0:T(1,128)}', space=vmem, size = 0x12000, scoped, tag = 'internal scratch']
  %s0 = inlined_call_operand.vmem [shape: f32[1,32,64], index: 0, kind: input, shape index: {}]
  %s1 = inlined_call_operand.hbm [shape: bf16[352,256], index: 1, kind: input, shape index: {}]
  %s2 = inlined_call_operand.vmem [shape: bf16[8,256], index: 2, kind: input, shape index: {}]
  %s3 = inlined_call_operand.vmem [shape: f32[1,32,128], index: 3, kind: output, shape index: {}]
  %s4 = sld [smem:[#allocation0]]
  $region26: #{campplus_forward.1} parent=0
    _
  %s6 = ssub.s32 1, %s4
  %s7 = scalar_select 0, %s6, %s4
  $region1: #{campplus_forward.1} parent=0
    #allocation2 [shape = 'u8[180224]{0}', space=vmem, size = 0x2c000, scoped, tag = 'input window, operand 1, single buffered']
    #allocation3 [shape = 's32[1]{0}', space=sflag, size = 0x4, scoped, tag = 'scoped memory for campplus_forward.1']
    %8 = vsyncpa [#allocation3], 0
    // Predicated region
    $region2: #{campplus_forward.1} parent=1 // pred_check
      _
    $region3: #{campplus_forward.1} parent=1 // pred_check_branch
      %10 = sbr.rel (0) target = $region5
    $region4: #{campplus_forward.1} parent=1 // pred_region
      _
    $region5: #{campplus_forward.1} parent=1 // pred_fallthru
      _
    // Predicated region
    $region6: #{campplus_forward.1} parent=1 // pred_check
      _
    $region7: #{campplus_forward.1} parent=1 // pred_check_branch
      %12 = sbr.rel (0) target = $region9
    $region8: #{campplus_forward.1} parent=1 // pred_region
      %s14 = ssub.s32 5632, 5632
      %15 = vsyncadd [#allocation3], %s14
      %s16 = sshll.u32 [#allocation2], 4
      %s17 = int_to_ptr.vmem [resolvable:$true] %s16
      %22 = dma.hbm_to_vmem [thread:$0]  %s1, 5632, %s17, [#allocation3], 128, 128, 8
    $region9: #{campplus_forward.1} parent=1 // pred_fallthru
      _
    // Predicated region
    $region10: #{campplus_forward.1} parent=1 // pred_check
      _
    $region11: #{campplus_forward.1} parent=1 // pred_check_branch
      %24 = sbr.rel (0) target = $region13
    $region12: #{campplus_forward.1} parent=1 // pred_region
      _
    $region13: #{campplus_forward.1} parent=1 // pred_fallthru
      _
    // Predicated region
    $region14: #{campplus_forward.1} parent=1 // pred_check
      _
    $region15: #{campplus_forward.1} parent=1 // pred_check_branch
      %26 = sbr.rel (0) target = $region17
    $region16: #{campplus_forward.1} parent=1 // pred_region
      %27 = dma.done [#allocation3], 5632
    $region17: #{campplus_forward.1} parent=1 // pred_fallthru
      _
    %v29 = vld [vmem:[%s0] sm:$0xff]
    %v30 = vld [vmem:[%s0 + $0x8] sm:$0xff]
    %v31 = vld [vmem:[%s0 + $0x10] sm:$0xff]
    %v32 = vld [vmem:[%s0 + $0x18] sm:$0xff]
    %v33 = vmul.f32 %v29, 3.0517578e-05
    %v34 = vmul.f32 %v30, 3.0517578e-05
    %v35 = vmul.f32 %v31, 3.0517578e-05
    %v36 = vmul.f32 %v32, 3.0517578e-05
    %vm37 = vcmask 523264
    %v38 = vsel %vm37, %v33, 0.0
    %39 = vadd.xlane.f32.xlu0 %v38
    %v40 = vpop.xlane.xlu0 %39
    %v41 = vsel %vm37, %v34, 0.0
    %42 = vadd.xlane.f32.xlu0 %v41
    %v43 = vpop.xlane.xlu0 %42
    %v44 = vsel %vm37, %v35, 0.0
    %45 = vadd.xlane.f32.xlu0 %v44
    %v46 = vpop.xlane.xlu0 %45
    %v47 = vsel %vm37, %v36, 0.0
    %48 = vadd.xlane.f32.xlu0 %v47
    %v49 = vpop.xlane.xlu0 %48
    %v50 = vadd.f32 %v40, %v43
    %v51 = vadd.f32 %v50, %v46
    %v52 = vadd.f32 %v51, %v49
    %v53 = vrot.slane %v52, 4
    %v54 = vadd.f32 %v52, %v53
    %v55 = vrot.slane %v54, 2
    %v56 = vadd.f32 %v54, %v55
    %v57 = vrot.slane %v56, 1
    %v58 = vadd.f32 %v56, %v57
    %v59 = vmul.f32 %v58, 0.00048828125
    %v60 = vsub.f32 %v33, %v59
    %v61 = vsub.f32 %v34, %v59
    %v62 = vsub.f32 %v35, %v59
    %v63 = vsub.f32 %v36, %v59
    %v64 = vpack.c.bf16 %v61, %v60
    %v65 = vpack.c.bf16 %v63, %v62
    %v66 = vld [vmem:[#allocation2] sm:$0xff]
    %v67 = vld [vmem:[#allocation2 + $0x8] sm:$0xff]
    %v68 = vld [vmem:[#allocation2 + $0x10] sm:$0xff]
    %v69 = vld [vmem:[#allocation2 + $0x18] sm:$0xff]
    %v70 = vld [vmem:[#allocation2 + $0x20] sm:$0xff]
    %v71 = vld [vmem:[#allocation2 + $0x28] sm:$0xff]
    %v72 = vld [vmem:[#allocation2 + $0x30] sm:$0xff]
    %v73 = vld [vmem:[#allocation2 + $0x38] sm:$0xff]
    %v82 = vunpack.c.l.b16 %v66
    %v83 = vunpack.c.h.b16 %v66
    %v84 = vunpack.c.l.b16 %v67
    %v85 = vunpack.c.h.b16 %v67
    %v86 = vunpack.c.l.b16 %v68
    %v87 = vunpack.c.h.b16 %v68
    %v88 = vunpack.c.l.b16 %v69
    %v89 = vunpack.c.h.b16 %v69
    %v90 = vunpack.c.l.b16 %v70
    %v91 = vunpack.c.h.b16 %v70
    %v92 = vunpack.c.l.b16 %v71
    %v93 = vunpack.c.h.b16 %v71
    %v94 = vunpack.c.l.b16 %v72
    %v95 = vunpack.c.h.b16 %v72
    %v96 = vunpack.c.l.b16 %v73
    %v97 = vunpack.c.h.b16 %v73
    %v98 = vpack.c.b16 %v84, %v82
    %v99 = vpack.c.b16 %v85, %v83
    %v100 = vpack.c.b16 %v88, %v86
    %v101 = vpack.c.b16 %v89, %v87
    %v102 = vpack.c.b16 %v92, %v90
    %v103 = vpack.c.b16 %v93, %v91
    %v104 = vpack.c.b16 %v96, %v94
    %v105 = vpack.c.b16 %v97, %v95
    %v115 = vsel %vm37, %v64, 0
    %v118 = vsel %vm37, %v65, 0
    %120 = vmatprep.subr.bf16.mxu0 %v99
    %121 = vmatpush1.bf16.msra.mxu0 %v98
    %122 = vmatprep.subr.bf16.mxu0 %v101
    %123 = vmatpush1.bf16.msra.mxu0 %v100
    %124 = vmatprep.subr.bf16.mxu0 %v103
    %125 = vmatpush1.bf16.msra.mxu0 %v102
    %126 = vmatprep.subr.bf16.mxu0 %v105
    %127 = vmatpush1.bf16.msra.mxu0 %v104
    %128 = vmatprep.subr.bf16.mxu0 0
    %129 = vmatpush1.bf16.msra.mxu0 0
    %130 = vmatprep.subr.bf16.mxu0 0
    %131 = vmatpush1.bf16.msra.mxu0 0
    %132 = vmatprep.subr.bf16.mxu0 0
    %133 = vmatpush1.bf16.msra.mxu0 0
    %134 = vmatprep.subr.bf16.mxu0 0
    %135 = vmatpush1.bf16.msra.mxu0 0
    %136 = vmatprep.subr.bf16.mxu0 0
    %137 = vmatpush1.bf16.msra.mxu0 0
    %138 = vmatprep.subr.bf16.mxu0 0
    %139 = vmatpush1.bf16.msra.mxu0 0
    %140 = vmatprep.subr.bf16.mxu0 0
    %141 = vmatpush1.bf16.msra.mxu0 0
    %142 = vmatprep.subr.bf16.mxu0 0
    %143 = vmatpush1.bf16.msra.mxu0 0
    %144 = vmatprep.subr.bf16.mxu0 0
    %145 = vmatpush1.bf16.msra.mxu0 0
    %146 = vmatprep.subr.bf16.mxu0 0
    %147 = vmatpush1.bf16.msra.mxu0 0
    %148 = vmatprep.subr.bf16.mxu0 0
    %149 = vmatpush1.bf16.msra.mxu0 0
    %150 = vmatprep.subr.bf16.mxu0 0
    %151 = vmatpush1.bf16.msra.mxu0 0
    %152 = vmatprep.mubr.bf16.mxu0 0
    %153 = vmatmul.mubr.bf16.gmra.mrb[0].mxu0 %v115
    %v154 = vpop.f32.mrb[0].mxu0
    %v155 = vadd.f32 0.0, %v154
    %v156 = vpop.f32.mrb[0].mxu0
    %v157 = vpop.f32.mrb[0].mxu0
    %v158 = vadd.f32 0.0, %v157
    %v159 = vpop.f32.mrb[0].mxu0
    %160 = vmatprep.mubr.bf16.mxu0 0
    %161 = vmatmul.mubr.bf16.gmra.mrb[0].mxu0 %v118
    %v162 = vpop.f32.mrb[0].mxu0
    %v163 = vadd.f32 0.0, %v162
    %v164 = vpop.f32.mrb[0].mxu0
    %v165 = vpop.f32.mrb[0].mxu0
    %v166 = vadd.f32 0.0, %v165
    %v167 = vpop.f32.mrb[0].mxu0
    %168 = vdwg.mxu0
    %v169 = vmul.f32 %v155, %v155
    %v170 = vmul.f32 %v158, %v158
    %v171 = vmul.f32 %v163, %v163
    %v172 = vmul.f32 %v166, %v166
    %v173 = vpack.c.bf16 %v170, %v169
    %v174 = vpack.c.bf16 %v172, %v171
    %v175 = vld [vmem:[#allocation2 + $0x40] sm:$0xf]
    %v176 = vld [vmem:[#allocation2 + $0x48] sm:$0xf]
    %v177 = vld [vmem:[#allocation2 + $0x50] sm:$0xf]
    %v178 = vld [vmem:[#allocation2 + $0x58] sm:$0xf]
    %v179 = vld [vmem:[#allocation2 + $0x60] sm:$0xf]
    %v180 = vld [vmem:[#allocation2 + $0x68] sm:$0xf]
    %v181 = vld [vmem:[#allocation2 + $0x70] sm:$0xf]
    %v182 = vld [vmem:[#allocation2 + $0x78] sm:$0xf]
    %v183 = vld [vmem:[#allocation2 + $0x80] sm:$0xf]
    %v184 = vld [vmem:[#allocation2 + $0x88] sm:$0xf]
    %v185 = vld [vmem:[#allocation2 + $0x90] sm:$0xf]
    %v186 = vld [vmem:[#allocation2 + $0x98] sm:$0xf]
    %v187 = vld [vmem:[#allocation2 + $0xa0] sm:$0xf]
    %v188 = vld [vmem:[#allocation2 + $0xa8] sm:$0xf]
    %v189 = vld [vmem:[#allocation2 + $0xb0] sm:$0xf]
    %v190 = vld [vmem:[#allocation2 + $0xb8] sm:$0xf]
    %v207 = vunpack.c.l.b16 %v175
    %v208 = vunpack.c.l.b16 %v176
    %v209 = vunpack.c.l.b16 %v177
    %v210 = vunpack.c.l.b16 %v178
    %v211 = vunpack.c.l.b16 %v179
    %v212 = vunpack.c.l.b16 %v180
    %v213 = vunpack.c.l.b16 %v181
    %v214 = vunpack.c.l.b16 %v182
    %v215 = vunpack.c.l.b16 %v183
    %v216 = vunpack.c.l.b16 %v184
    %v217 = vunpack.c.l.b16 %v185
    %v218 = vunpack.c.l.b16 %v186
    %v219 = vunpack.c.l.b16 %v187
    %v220 = vunpack.c.l.b16 %v188
    %v221 = vunpack.c.l.b16 %v189
    %v222 = vunpack.c.l.b16 %v190
    %v223 = vpack.c.b16 %v208, %v207
    %v224 = vpack.c.b16 %v210, %v209
    %v225 = vpack.c.b16 %v212, %v211
    %v226 = vpack.c.b16 %v214, %v213
    %v227 = vpack.c.b16 %v216, %v215
    %v228 = vpack.c.b16 %v218, %v217
    %v229 = vpack.c.b16 %v220, %v219
    %v230 = vpack.c.b16 %v222, %v221
    %239 = vmatprep.subr.bf16.mxu0 0
    %240 = vmatpush1.bf16.msra.mxu0 %v223
    %241 = vmatprep.subr.bf16.mxu0 0
    %242 = vmatpush1.bf16.msra.mxu0 %v224
    %243 = vmatprep.subr.bf16.mxu0 0
    %244 = vmatpush1.bf16.msra.mxu0 %v225
    %245 = vmatprep.subr.bf16.mxu0 0
    %246 = vmatpush1.bf16.msra.mxu0 %v226
    %247 = vmatprep.subr.bf16.mxu0 0
    %248 = vmatpush1.bf16.msra.mxu0 %v227
    %249 = vmatprep.subr.bf16.mxu0 0
    %250 = vmatpush1.bf16.msra.mxu0 %v228
    %251 = vmatprep.subr.bf16.mxu0 0
    %252 = vmatpush1.bf16.msra.mxu0 %v229
    %253 = vmatprep.subr.bf16.mxu0 0
    %254 = vmatpush1.bf16.msra.mxu0 %v230
    %255 = vmatprep.subr.bf16.mxu0 0
    %256 = vmatpush1.bf16.msra.mxu0 0
    %257 = vmatprep.subr.bf16.mxu0 0
    %258 = vmatpush1.bf16.msra.mxu0 0
    %259 = vmatprep.subr.bf16.mxu0 0
    %260 = vmatpush1.bf16.msra.mxu0 0
    %261 = vmatprep.subr.bf16.mxu0 0
    %262 = vmatpush1.bf16.msra.mxu0 0
    %263 = vmatprep.subr.bf16.mxu0 0
    %264 = vmatpush1.bf16.msra.mxu0 0
    %265 = vmatprep.subr.bf16.mxu0 0
    %266 = vmatpush1.bf16.msra.mxu0 0
    %267 = vmatprep.subr.bf16.mxu0 0
    %268 = vmatpush1.bf16.msra.mxu0 0
    %269 = vmatprep.subr.bf16.mxu0 0
    %270 = vmatpush1.bf16.msra.mxu0 0
    %271 = vmatprep.mubr.bf16.mxu0 0
    %272 = vmatmul.mubr.bf16.gmra.mrb[0].mxu0 %v173
    %v273 = vpop.f32.mrb[0].mxu0
    %v274 = vadd.f32 0.0, %v273
    %v275 = vpop.f32.mrb[0].mxu0
    %v276 = vpop.f32.mrb[0].mxu0
    %v277 = vadd.f32 0.0, %v276
    %v278 = vpop.f32.mrb[0].mxu0
    %279 = vmatprep.mubr.bf16.mxu0 0
    %280 = vmatmul.mubr.bf16.gmra.mrb[0].mxu0 %v174
    %v281 = vpop.f32.mrb[0].mxu0
    %v282 = vadd.f32 0.0, %v281
    %v283 = vpop.f32.mrb[0].mxu0
    %v284 = vpop.f32.mrb[0].mxu0
    %v285 = vadd.f32 0.0, %v284
    %v286 = vpop.f32.mrb[0].mxu0
    %287 = vdwg.mxu0
    %v288 = vmax.f32 %v274, 1e-05
    %v289 = vmax.f32 %v277, 1e-05
    %v290 = vmax.f32 %v282, 1e-05
    %v291 = vmax.f32 %v285, 1e-05
    %v292 = vlog2.pop %v288
    %v293 = vmul.f32 %v292, 0.6931472
    %v294 = vlog2.pop %v289
    %v295 = vmul.f32 %v294, 0.6931472
    %v296 = vlog2.pop %v290
    %v297 = vmul.f32 %v296, 0.6931472
    %v298 = vlog2.pop %v291
    %v299 = vmul.f32 %v298, 0.6931472
    %v300 = vlaneseq
    %v301 = vshrl.u32 %v300, 7
    %v302 = vadd.s32 %v301, 8
    %v303 = vadd.s32 %v301, 16
    %v304 = vadd.s32 %v301, 24
    %v305 = vlaneseq
    %v306 = vand.u32 %v305, 127
    %vm307 = vcmp.lt.s32.totalorder %v301, 31
    %vm308 = vcmp.lt.s32.totalorder %v302, 31
    %vm309 = vcmp.lt.s32.totalorder %v303, 31
    %vm310 = vcmp.lt.s32.totalorder %v304, 31
    %v311 = vsel %vm307, %v293, 0.0
    %v312 = vsel %vm308, %v295, 0.0
    %v313 = vsel %vm309, %v297, 0.0
    %v314 = vsel %vm310, %v299, 0.0
    %v315 = vadd.f32 %v311, %v312
    %v316 = vadd.f32 %v315, %v313
    %v317 = vadd.f32 %v316, %v314
    %v318 = vrot.slane %v317, 4
    %v319 = vadd.f32 %v317, %v318
    %v320 = vrot.slane %v319, 2
    %v321 = vadd.f32 %v319, %v320
    %v322 = vrot.slane %v321, 1
    %v323 = vadd.f32 %v321, %v322
    %v324 = vmul.f32 %v323, 0.032258064
    %v325 = vsub.f32 %v293, %v324
    %v326 = vsub.f32 %v295, %v324
    %v327 = vsub.f32 %v297, %v324
    %v328 = vsub.f32 %v299, %v324
    %v329 = vld [vmem:[#allocation2 + $0xc0] sm:$0xff]
    %v330 = vld [vmem:[#allocation2 + $0xc8] sm:$0xff]
    %v331 = vld [vmem:[#allocation2 + $0xd0] sm:$0xff]
    %v332 = vld [vmem:[#allocation2 + $0xd8] sm:$0xff]
    %v333 = vld [vmem:[#allocation2 + $0xe0] sm:$0xff]
    %v334 = vld [vmem:[#allocation2 + $0xe8] sm:$0xff]
    %v335 = vld [vmem:[#allocation2 + $0xf0] sm:$0xff]
    %v336 = vld [vmem:[#allocation2 + $0xf8] sm:$0xff]
    %v337 = vld [vmem:[#allocation2 + $0x100] sm:$0xff]
    %v338 = vld [vmem:[#allocation2 + $0x108] sm:$0xff]
    %v339 = vld [vmem:[#allocation2 + $0x110] sm:$0xff]
    %v340 = vld [vmem:[#allocation2 + $0x118] sm:$0xff]
    %v341 = vld [vmem:[#allocation2 + $0x120] sm:$0xff]
    %v342 = vld [vmem:[#allocation2 + $0x128] sm:$0xff]
    %v343 = vld [vmem:[#allocation2 + $0x130] sm:$0xff]
    %v344 = vld [vmem:[#allocation2 + $0x138] sm:$0xff]
    %v345 = vld [vmem:[#allocation2 + $0x140] sm:$0xff]
    %v346 = vld [vmem:[#allocation2 + $0x148] sm:$0xff]
    %v347 = vld [vmem:[#allocation2 + $0x150] sm:$0xff]
    %v348 = vld [vmem:[#allocation2 + $0x158] sm:$0xff]
    %v349 = vpack.c.bf16 %v326, %v325
    %v350 = vpack.c.bf16 %v328, %v327
    %v351 = vunpack.c.l.bf16 %v345
    %v352 = vunpack.c.h.bf16 %v345
    %v353 = vunpack.c.l.bf16 %v346
    %v354 = vunpack.c.h.bf16 %v346
    %v355 = vunpack.c.l.bf16 %v347
    %v356 = vunpack.c.h.bf16 %v347
    %v357 = vunpack.c.l.bf16 %v348
    %v358 = vunpack.c.h.bf16 %v348
    %v375 = vunpack.c.l.b16 %v329
    %v376 = vunpack.c.h.b16 %v329
    %v377 = vunpack.c.l.b16 %v330
    %v378 = vunpack.c.h.b16 %v330
    %v379 = vunpack.c.l.b16 %v331
    %v380 = vunpack.c.h.b16 %v331
    %v381 = vunpack.c.l.b16 %v332
    %v382 = vunpack.c.h.b16 %v332
    %v383 = vunpack.c.l.b16 %v333
    %v384 = vunpack.c.h.b16 %v333
    %v385 = vunpack.c.l.b16 %v334
    %v386 = vunpack.c.h.b16 %v334
    %v387 = vunpack.c.l.b16 %v335
    %v388 = vunpack.c.h.b16 %v335
    %v389 = vunpack.c.l.b16 %v336
    %v390 = vunpack.c.h.b16 %v336
    %v391 = vunpack.c.l.b16 %v337
    %v392 = vunpack.c.h.b16 %v337
    %v393 = vunpack.c.l.b16 %v338
    %v394 = vunpack.c.h.b16 %v338
    %v395 = vunpack.c.l.b16 %v339
    %v396 = vunpack.c.h.b16 %v339
    %v397 = vunpack.c.l.b16 %v340
    %v398 = vunpack.c.h.b16 %v340
    %v399 = vunpack.c.l.b16 %v341
    %v400 = vunpack.c.h.b16 %v341
    %v401 = vunpack.c.l.b16 %v342
    %v402 = vunpack.c.h.b16 %v342
    %v403 = vunpack.c.l.b16 %v343
    %v404 = vunpack.c.h.b16 %v343
    %v405 = vunpack.c.l.b16 %v344
    %v406 = vunpack.c.h.b16 %v344
    %v407 = vpack.c.b16 %v377, %v375
    %v408 = vpack.c.b16 %v378, %v376
    %v409 = vpack.c.b16 %v381, %v379
    %v410 = vpack.c.b16 %v382, %v380
    %v411 = vpack.c.b16 %v385, %v383
    %v412 = vpack.c.b16 %v386, %v384
    %v413 = vpack.c.b16 %v389, %v387
    %v414 = vpack.c.b16 %v390, %v388
    %v415 = vpack.c.b16 %v393, %v391
    %v416 = vpack.c.b16 %v394, %v392
    %v417 = vpack.c.b16 %v397, %v395
    %v418 = vpack.c.b16 %v398, %v396
    %v419 = vpack.c.b16 %v401, %v399
    %v420 = vpack.c.b16 %v402, %v400
    %v421 = vpack.c.b16 %v405, %v403
    %v422 = vpack.c.b16 %v406, %v404
    %439 = vmatprep.subr.bf16.mxu0 %v408
    %440 = vmatpush1.bf16.msra.mxu0 %v407
    %441 = vmatprep.subr.bf16.mxu0 %v410
    %442 = vmatpush1.bf16.msra.mxu0 %v409
    %443 = vmatprep.subr.bf16.mxu0 %v412
    %444 = vmatpush1.bf16.msra.mxu0 %v411
    %445 = vmatprep.subr.bf16.mxu0 %v414
    %446 = vmatpush1.bf16.msra.mxu0 %v413
    %447 = vmatprep.subr.bf16.mxu0 %v416
    %448 = vmatpush1.bf16.msra.mxu0 %v415
    %449 = vmatprep.subr.bf16.mxu0 %v418
    %450 = vmatpush1.bf16.msra.mxu0 %v417
    %451 = vmatprep.subr.bf16.mxu0 %v420
    %452 = vmatpush1.bf16.msra.mxu0 %v419
    %453 = vmatprep.subr.bf16.mxu0 %v422
    %454 = vmatpush1.bf16.msra.mxu0 %v421
    %455 = vmatprep.subr.bf16.mxu0 0
    %456 = vmatpush1.bf16.msra.mxu0 0
    %457 = vmatprep.subr.bf16.mxu0 0
    %458 = vmatpush1.bf16.msra.mxu0 0
    %459 = vmatprep.subr.bf16.mxu0 0
    %460 = vmatpush1.bf16.msra.mxu0 0
    %461 = vmatprep.subr.bf16.mxu0 0
    %462 = vmatpush1.bf16.msra.mxu0 0
    %463 = vmatprep.subr.bf16.mxu0 0
    %464 = vmatpush1.bf16.msra.mxu0 0
    %465 = vmatprep.subr.bf16.mxu0 0
    %466 = vmatpush1.bf16.msra.mxu0 0
    %467 = vmatprep.subr.bf16.mxu0 0
    %468 = vmatpush1.bf16.msra.mxu0 0
    %469 = vmatprep.subr.bf16.mxu0 0
    %470 = vmatpush1.bf16.msra.mxu0 0
    %471 = vmatprep.mubr.bf16.mxu0 0
    %472 = vmatmul.mubr.bf16.gmra.mrb[0].mxu0 %v349
    %v473 = vpop.f32.mrb[0].mxu0
    %v474 = vadd.f32 %v351, %v473
    %v475 = vpop.f32.mrb[0].mxu0
    %v476 = vadd.f32 %v352, %v475
    %v477 = vpop.f32.mrb[0].mxu0
    %v478 = vadd.f32 %v353, %v477
    %v479 = vpop.f32.mrb[0].mxu0
    %v480 = vadd.f32 %v354, %v479
    %481 = vmatprep.mubr.bf16.mxu0 0
    %482 = vmatmul.mubr.bf16.gmra.mrb[0].mxu0 %v350
    %v483 = vpop.f32.mrb[0].mxu0
    %v484 = vadd.f32 %v355, %v483
    %v485 = vpop.f32.mrb[0].mxu0
    %v486 = vadd.f32 %v356, %v485
    %v487 = vpop.f32.mrb[0].mxu0
    %v488 = vadd.f32 %v357, %v487
    %v489 = vpop.f32.mrb[0].mxu0
    %v490 = vadd.f32 %v358, %v489
    %491 = vdwg.mxu0
    %v492 = vpack.c.bf16 %v478, %v474
    %v493 = vpack.c.bf16 %v480, %v476
    %v494 = vpack.c.bf16 %v488, %v484
    %v495 = vpack.c.bf16 %v490, %v486
    %v496 = vld [vmem:[%s2] sm:$0xff]
    %v498 = vunpack.c.l.b16 %v496
    %v499 = vunpack.c.h.b16 %v496
    %v500 = vpack.c.b16 %v498, %v498
    %v501 = vpack.c.b16 %v499, %v499
    %504 = vmatprep.subr.bf16.mxu0 %v501
    %505 = vmatpush1.bf16.xpose.msra.mxu0 %v500
    %506 = vmatprep.subr.bf16.mxu0 0
    %507 = vmatpush1.bf16.xpose.msra.mxu0 0
    %508 = vmatprep.subr.bf16.mxu0 0
    %509 = vmatpush1.bf16.xpose.msra.mxu0 0
    %510 = vmatprep.subr.bf16.mxu0 0
    %511 = vmatpush1.bf16.xpose.msra.mxu0 0
    %512 = vmatprep.subr.bf16.mxu0 0
    %513 = vmatpush1.bf16.xpose.msra.mxu0 0
    %514 = vmatprep.subr.bf16.mxu0 0
    %515 = vmatpush1.bf16.xpose.msra.mxu0 0
    %516 = vmatprep.subr.bf16.mxu0 0
    %517 = vmatpush1.bf16.xpose.msra.mxu0 0
    %518 = vmatprep.subr.bf16.mxu0 0
    %519 = vmatpush1.bf16.xpose.msra.mxu0 0
    %520 = vmatprep.subr.bf16.mxu0 0
    %521 = vmatpush1.bf16.xpose.msra.mxu0 0
    %522 = vmatprep.subr.bf16.mxu0 0
    %523 = vmatpush1.bf16.xpose.msra.mxu0 0
    %524 = vmatprep.subr.bf16.mxu0 0
    %525 = vmatpush1.bf16.xpose.msra.mxu0 0
    %526 = vmatprep.subr.bf16.mxu0 0
    %527 = vmatpush1.bf16.xpose.msra.mxu0 0
    %528 = vmatprep.subr.bf16.mxu0 0
    %529 = vmatpush1.bf16.xpose.msra.mxu0 0
    %530 = vmatprep.subr.bf16.mxu0 0
    %531 = vmatpush1.bf16.xpose.msra.mxu0 0
    %532 = vmatprep.subr.bf16.mxu0 0
    %533 = vmatpush1.bf16.xpose.msra.mxu0 0
    %534 = vmatprep.subr.bf16.mxu0 0
    %535 = vmatpush1.bf16.xpose.msra.mxu0 0
    %536 = vmatprep.mubr.bf16.mxu0 %v493
    %537 = vmatmul.mubr.bf16.gmra.mrb[0].mxu0 %v492
    %v538 = vpop.f32.mrb[0].mxu0
    %v539 = vadd.f32 0.0, %v538
    %v540 = vpop.f32.mrb[0].mxu0
    %v541 = vpop.f32.mrb[0].mxu0
    %v542 = vadd.f32 0.0, %v541
    %v543 = vpop.f32.mrb[0].mxu0
    %544 = vmatprep.mubr.bf16.mxu0 %v495
    %545 = vmatmul.mubr.bf16.gmra.mrb[0].mxu0 %v494
    %v546 = vpop.f32.mrb[0].mxu0
    %v547 = vadd.f32 0.0, %v546
    %v548 = vpop.f32.mrb[0].mxu0
    %v549 = vpop.f32.mrb[0].mxu0
    %v550 = vadd.f32 0.0, %v549
    %v551 = vpop.f32.mrb[0].mxu0
    %552 = vdwg.mxu0
    %557 = vrot.lane.b32.xlu0 %v539, 1
    %v558 = vpop.permute.xlu0 %557
    %559 = vrot.lane.b32.xlu0 %v542, 1
    %v560 = vpop.permute.xlu0 %559
    %561 = vrot.lane.b32.xlu0 %v547, 1
    %v562 = vpop.permute.xlu0 %561
    %563 = vrot.lane.b32.xlu0 %v550, 1
    %v564 = vpop.permute.xlu0 %563
    %vm569 = vcmp.gt.f32.partialorder %v539, %v558
    %vm570 = vcmp.gt.f32.partialorder %v542, %v560
    %vm571 = vcmp.gt.f32.partialorder %v547, %v562
    %vm572 = vcmp.gt.f32.partialorder %v550, %v564
    %v573 = vsel %vm569, 1, 0
    %v574 = vsel %vm570, 1, 0
    %v575 = vsel %vm571, 1, 0
    %v576 = vsel %vm572, 1, 0
    %v577 = vcvt.s32.f32 %v573
    %v578 = vcvt.s32.f32 %v574
    %v579 = vcvt.s32.f32 %v575
    %v580 = vcvt.s32.f32 %v576
    %581 = vset.pattern.permute.xlu0 0
    %582 = vperm.xlu0 %581, %v539
    %v583 = vpop.permute.xlu0 %582
    %585 = vset.pattern.permute.xlu0 0
    %586 = vperm.xlu0 %585, %v542
    %v587 = vpop.permute.xlu0 %586
    %589 = vset.pattern.permute.xlu0 0
    %590 = vperm.xlu0 %589, %v547
    %v591 = vpop.permute.xlu0 %590
    %593 = vset.pattern.permute.xlu0 0
    %594 = vperm.xlu0 %593, %v550
    %v595 = vpop.permute.xlu0 %594
    %v597 = vadd.f32 %v583, 0.0
    %v598 = vadd.f32 %v587, 0.0
    %v599 = vadd.f32 %v591, 0.0
    %v600 = vadd.f32 %v595, 0.0
    %601 = vset.pattern.permute.xlu0 1
    %602 = vperm.xlu0 %601, %v539
    %v603 = vpop.permute.xlu0 %602
    %605 = vset.pattern.permute.xlu0 1
    %606 = vperm.xlu0 %605, %v542
    %v607 = vpop.permute.xlu0 %606
    %609 = vset.pattern.permute.xlu0 1
    %610 = vperm.xlu0 %609, %v547
    %v611 = vpop.permute.xlu0 %610
    %613 = vset.pattern.permute.xlu0 1
    %614 = vperm.xlu0 %613, %v550
    %v615 = vpop.permute.xlu0 %614
    %v617 = vadd.f32 %v603, 0.0
    %v618 = vadd.f32 %v607, 0.0
    %v619 = vadd.f32 %v611, 0.0
    %v620 = vadd.f32 %v615, 0.0
    %622 = vset.pattern.permute.xlu0 1
    %623 = vperm.xlu0 %622, %v577
    %v624 = vpop.permute.xlu0 %623
    %627 = vset.pattern.permute.xlu0 1
    %628 = vperm.xlu0 %627, %v578
    %v629 = vpop.permute.xlu0 %628
    %632 = vset.pattern.permute.xlu0 1
    %633 = vperm.xlu0 %632, %v579
    %v634 = vpop.permute.xlu0 %633
    %637 = vset.pattern.permute.xlu0 1
    %638 = vperm.xlu0 %637, %v580
    %v639 = vpop.permute.xlu0 %638
    %v641 = vadd.f32 %v624, 0.0
    %v642 = vadd.f32 %v629, 0.0
    %v643 = vadd.f32 %v634, 0.0
    %v644 = vadd.f32 %v639, 0.0
    %vm645 = vcmp.eq.s32.totalorder %v306, 0
    %v646 = vsel %vm645, %v597, 0.0
    %v647 = vsel %vm645, %v598, 0.0
    %v648 = vsel %vm645, %v599, 0.0
    %v649 = vsel %vm645, %v600, 0.0
    %vm650 = vcmp.eq.s32.totalorder %v306, 1
    %v651 = vsel %vm650, %v617, %v646
    %v652 = vsel %vm650, %v618, %v647
    %v653 = vsel %vm650, %v619, %v648
    %v654 = vsel %vm650, %v620, %v649
    %vm655 = vcmp.eq.s32.totalorder %v306, 2
    %v656 = vsel %vm655, %v641, %v651
    %v657 = vsel %vm655, %v642, %v652
    %v658 = vsel %vm655, %v643, %v653
    %v659 = vsel %vm655, %v644, %v654
    %660 = vst [vmem:[%s3] sm:$0xff] %v656
    %661 = vst [vmem:[%s3 + $0x8] sm:$0xff] %v657
    %662 = vst [vmem:[%s3 + $0x10] sm:$0xff] %v658
    %663 = vst [vmem:[%s3 + $0x18] sm:$0xff] %v659
    // Predicated region
    $region18: #{campplus_forward.1} parent=1 // pred_check
      _
    $region19: #{campplus_forward.1} parent=1 // pred_check_branch
      %665 = sbr.rel (0) target = $region21
    $region20: #{campplus_forward.1} parent=1 // pred_region
      _
    $region21: #{campplus_forward.1} parent=1 // pred_fallthru
      _
    // Predicated region
    $region22: #{campplus_forward.1} parent=1 // pred_check
      _
    $region23: #{campplus_forward.1} parent=1 // pred_check_branch
      %667 = sbr.rel (0) target = $region25
    $region24: #{campplus_forward.1} parent=1 // pred_region
      _
    $region25: #{campplus_forward.1} parent=1 // pred_fallthru
      _
    %668 = vsyncpa [#allocation3], 1

</llo_original>
